<compile_context>
chip_gen: v6e
topology: v6e:2x2x1
jax: 0.10.0
libtpu: 0.0.40
codegen_flags: <defaults>
</compile_context>

<pallas_src>
import functools

import jax
import jax.numpy as jnp
from jax.experimental import pallas as pl
from jax.experimental.pallas import tpu as pltpu

HIDDEN = 128


def _round_up(n, m):
    return ((n + m - 1) // m) * m


def _footprint_bytes(tb, d, with_recon):
    # bf16 weights (default double-buffered even though grid-invariant) +
    # double-buffered streamed f32 x tile (+ recon tile) + score tile + slack.
    weights = 2 * 2 * (2 * d * HIDDEN + 2 * HIDDEN * HIDDEN)
    stream = tb * (8 * d * (2 if with_recon else 1) + 8)
    return weights + stream + (2 << 20)


def _pick_tb(b, d, with_recon, budget_bytes=28 << 20):
    """Largest batch tile that fits the per-step VMEM budget (v7x: 64 MiB/TC),
    does not pad the batch absurdly, and leaves >=2 grid steps so both v7x
    TensorCores get work under dimension_semantics=('parallel',)."""
    b8 = _round_up(b, 8)
    for tb in (512, 256, 128, 64, 32, 16):
        if tb > b8:
            continue
        if _footprint_bytes(tb, d, with_recon) > budget_bytes:
            continue
        bp = _round_up(b, tb)
        if bp - b > max(64, b // 4):      # too much batch-padding waste
            continue
        if bp // tb < 2:                  # keep both v7x TCs busy
            continue
        return tb
    return 8


# ---------------------------------------------------------------------------
# Kernels
# ---------------------------------------------------------------------------

def _ae_layers(x_ref, w1_ref, b1_ref, w2_ref, b2_ref, w3_ref, b3_ref,
               w4_ref, b4_ref):
    """Shared 4-layer (Linear+ReLU) body. Returns (x_f32, recon_f32)."""
    x = x_ref[...].astype(jnp.float32)

    def layer(h, w_ref, b_ref):
        a = jnp.dot(h.astype(jnp.bfloat16), w_ref[...],
                    preferred_element_type=jnp.float32)
        return jnp.maximum(a + b_ref[...], 0.0)

    h = layer(x, w1_ref, b1_ref)          # [tb, 128]
    h = layer(h, w2_ref, b2_ref)          # [tb, 128]
    h = layer(h, w3_ref, b3_ref)          # [tb, 128]
    recon = layer(h, w4_ref, b4_ref)      # [tb, D] f32
    return x, recon


def _fwd_kernel(*refs, inv_d):
    (x_ref, w1, b1, w2, b2, w3, b3, w4, b4, o_ref, s_ref) = refs
    x, recon = _ae_layers(x_ref, w1, b1, w2, b2, w3, b3, w4, b4)
    o_ref[...] = recon.astype(o_ref.dtype)
    diff = recon - x
    s_ref[...] = jnp.sum(diff * diff, axis=-1, keepdims=True) * inv_d


def _scores_kernel(*refs, inv_d):
    (x_ref, w1, b1, w2, b2, w3, b3, w4, b4, s_ref) = refs
    x, recon = _ae_layers(x_ref, w1, b1, w2, b2, w3, b3, w4, b4)
    diff = recon - x
    s_ref[...] = jnp.sum(diff * diff, axis=-1, keepdims=True) * inv_d


# ---------------------------------------------------------------------------
# Wrappers
# ---------------------------------------------------------------------------

def _run(x, params, tb, with_recon):
    B, D = x.shape
    if tb is None:
        tb = _pick_tb(B, D, with_recon)
    else:
        tb = max(8, _round_up(int(tb), 8))   # keep the (8,128) sublane rule

    Bp = _round_up(B, tb)
    x_p = x if Bp == B else jnp.pad(x, ((0, Bp - B), (0, 0)))

    # bf16 weights (MXU operands), f32 biases. Kept at the real feature width.
    w1 = params["w1"].astype(jnp.bfloat16)
    w2 = params["w2"].astype(jnp.bfloat16)
    w3 = params["w3"].astype(jnp.bfloat16)
    w4 = params["w4"].astype(jnp.bfloat16)
    b1 = params["b1"].astype(jnp.float32)
    b2 = params["b2"].astype(jnp.float32)
    b3 = params["b3"].astype(jnp.float32)
    b4 = params["b4"].astype(jnp.float32)

    full = lambda i: (0, 0)
    in_specs = [
        pl.BlockSpec((tb, D), lambda i: (i, 0)),          # x tile
        pl.BlockSpec((D, HIDDEN), full),                  # w1
        pl.BlockSpec((1, HIDDEN), full),                  # b1
        pl.BlockSpec((HIDDEN, HIDDEN), full),             # w2
        pl.BlockSpec((1, HIDDEN), full),                  # b2
        pl.BlockSpec((HIDDEN, HIDDEN), full),             # w3
        pl.BlockSpec((1, HIDDEN), full),                  # b3
        pl.BlockSpec((HIDDEN, D), full),                  # w4
        pl.BlockSpec((1, D), full),                       # b4
    ]
    score_spec = pl.BlockSpec((tb, 1), lambda i: (i, 0))

    if with_recon:
        kernel = functools.partial(_fwd_kernel, inv_d=float(1.0 / D))
        out_shape = (jax.ShapeDtypeStruct((Bp, D), x.dtype),
                     jax.ShapeDtypeStruct((Bp, 1), jnp.float32))
        out_specs = [pl.BlockSpec((tb, D), lambda i: (i, 0)), score_spec]
    else:
        kernel = functools.partial(_scores_kernel, inv_d=float(1.0 / D))
        out_shape = jax.ShapeDtypeStruct((Bp, 1), jnp.float32)
        out_specs = score_spec

    needed = _footprint_bytes(tb, D, with_recon)
    vmem_limit = int(min(48 << 20, max(32 << 20, needed + (8 << 20))))

    outs = pl.pallas_call(
        kernel,
        out_shape=out_shape,
        grid_spec=pltpu.PrefetchScalarGridSpec(
            num_scalar_prefetch=0,
            grid=(Bp // tb,),
            in_specs=in_specs,
            out_specs=out_specs,
        ),
        compiler_params=pltpu.CompilerParams(
            dimension_semantics=("parallel",),
            vmem_limit_bytes=vmem_limit),
    )(x_p, w1, b1, w2, b2, w3, b3, w4, b4)

    if with_recon:
        out_p, scores_p = outs
        return out_p[:B], scores_p[:B, 0]
    return outs[:B, 0]


def autoencoder_forward_and_scores(x, params, *, tb=None):
    """x: [B, D] float32 -> (reconstruction [B, D], per-sample MSE [B])."""
    return _run(x, params, tb, with_recon=True)


def autoencoder_forward(x, params, *, tb=None):
    recon, _ = _run(x, params, tb, with_recon=True)
    return recon


def autoencoder_anomaly_scores(x, params, *, tb=None):
    """Scores-only variant: skips the f32 reconstruction writeback (the
    kernel is HBM-bandwidth-bound, so this is ~2x on every generation)."""
    return _run(x, params, tb, with_recon=False)


def get_anomaly_scores(x, params, *, use_pallas=None, tb=None):
    """Matches AutoEncoder.get_anomaly_scores: per-sample mean squared
    reconstruction error. Tiny problems stay on plain XLA (launch + batch
    padding overhead dominates); the crossover uses the padded work size."""
    B, D = x.shape
    if use_pallas is None:
        use_pallas = _round_up(B, 8) * D >= (1 << 17)
    if not use_pallas:
        recon = reference_forward(x, params)
        return jnp.mean((recon - x) ** 2, axis=1)
    return autoencoder_anomaly_scores(x, params, tb=tb)


# ---------------------------------------------------------------------------
# Parameters & references
# ---------------------------------------------------------------------------

def init_params(key, input_shape):
    """Deterministic init mimicking nn.Linear (uniform +/-1/sqrt(fan_in)).
    Weights are stored transposed ([in, out]) relative to PyTorch's [out, in]."""
    def linear(k, fan_in, fan_out):
        kw, kb = jax.random.split(k)
        bound = 1.0 / jnp.sqrt(fan_in)
        w = jax.random.uniform(kw, (fan_in, fan_out), jnp.float32, -bound, bound)
        b = jax.random.uniform(kb, (1, fan_out), jnp.float32, -bound, bound)
        return w, b

    k1, k2, k3, k4 = jax.random.split(key, 4)
    w1, b1 = linear(k1, input_shape, HIDDEN)   # encoder_hidden_layer
    w2, b2 = linear(k2, HIDDEN, HIDDEN)        # encoder_output_layer
    w3, b3 = linear(k3, HIDDEN, HIDDEN)        # decoder_hidden_layer
    w4, b4 = linear(k4, HIDDEN, input_shape)   # decoder_output_layer
    return dict(w1=w1, b1=b1, w2=w2, b2=b2, w3=w3, b3=b3, w4=w4, b4=b4)


def reference_forward(x, p):
    """Pure f32 reference matching the PyTorch module."""
    relu = lambda v: jnp.maximum(v, 0.0)
    h = relu(x @ p["w1"] + p["b1"])
    h = relu(h @ p["w2"] + p["b2"])
    h = relu(h @ p["w3"] + p["b3"])
    h = relu(h @ p["w4"] + p["b4"])
    return h


def reference_forward_bf16(x, p):
    """Reference with bf16 matmul operands / f32 accumulation (kernel numerics)."""
    bf = lambda a: a.astype(jnp.bfloat16)
    relu = lambda v: jnp.maximum(v, 0.0)
    dot = lambda a, b: jnp.dot(bf(a), bf(b), preferred_element_type=jnp.float32)
    h = relu(dot(x, p["w1"]) + p["b1"])
    h = relu(dot(h, p["w2"]) + p["b2"])
    h = relu(dot(h, p["w3"]) + p["b3"])
    h = relu(dot(h, p["w4"]) + p["b4"])
    return h


if __name__ == "__main__":
    key = jax.random.PRNGKey(0)
    k_params, k_x = jax.random.split(key)

    B, D = 16, 32                      # small shapes: batch=16, input_shape=32
    params = init_params(k_params, D)
    x = jax.random.normal(k_x, (B, D), jnp.float32)

    # Fused forward + anomaly scores (exercises the recon-emitting kernel).
    out, scores = autoencoder_forward_and_scores(x, params)
    # Scores-only kernel (the variant get_anomaly_scores uses at scale).
    scores_only = autoencoder_anomaly_scores(x, params)

    out = jax.block_until_ready(out)
    scores = jax.block_until_ready(scores)
    scores_only = jax.block_until_ready(scores_only)

    assert out.shape == (B, D)
    assert scores.shape == (B,)
    assert scores_only.shape == (B,)

    # Tight check vs the bf16-operand reference (same numerics as the kernel).
    ref_bf16 = reference_forward_bf16(x, params)
    assert jnp.allclose(out, ref_bf16, atol=2e-3, rtol=2e-3), "mismatch vs bf16 reference"

    # Loose check vs the pure-f32 PyTorch-equivalent reference.
    ref_f32 = reference_forward(x, params)
    assert jnp.allclose(out, ref_f32, atol=5e-2, rtol=5e-2), "mismatch vs f32 reference"

    # Fused MSE scores must match recomputing them from the kernel output.
    recomputed = jnp.mean((out - x) ** 2, axis=1)
    assert jnp.allclose(scores, recomputed, atol=1e-5, rtol=1e-5), "score mismatch"

    # Scores-only kernel must agree with the fused-forward scores.
    assert jnp.allclose(scores_only, scores, atol=1e-6, rtol=1e-6), "scores-only mismatch"

    print("KERNEL_OK")
</pallas_src>

<mosaic_0001>
module attributes {stable_mosaic.version = 11 : i64} {
  func.func @_fwd_kernel(%arg0: i32, %arg1: memref<8x32xf32, #tpu.memory_space<vmem>>, %arg2: memref<32x128xbf16, #tpu.memory_space<vmem>>, %arg3: memref<1x128xf32, #tpu.memory_space<vmem>>, %arg4: memref<128x128xbf16, #tpu.memory_space<vmem>>, %arg5: memref<1x128xf32, #tpu.memory_space<vmem>>, %arg6: memref<128x128xbf16, #tpu.memory_space<vmem>>, %arg7: memref<1x128xf32, #tpu.memory_space<vmem>>, %arg8: memref<128x32xbf16, #tpu.memory_space<vmem>>, %arg9: memref<1x32xf32, #tpu.memory_space<vmem>>, %arg10: memref<8x32xf32, #tpu.memory_space<vmem>>, %arg11: memref<8x1xf32, #tpu.memory_space<vmem>>) attributes {dimension_semantics = [#tpu.dimension_semantics<parallel>], iteration_bounds = array<i64: 2>, scalar_prefetch = 0 : i64, scratch_operands = 0 : i64, tpu.core_type = #tpu.core_type<tc>, window_params = [{transform_indices = @transform_0, window_bounds = array<i64: 8, 32>}, {pipeline_mode = #tpu.pipeline_mode<synchronous>, transform_indices = @transform_1, window_bounds = array<i64: 32, 128>}, {pipeline_mode = #tpu.pipeline_mode<synchronous>, transform_indices = @transform_2, window_bounds = array<i64: 1, 128>}, {pipeline_mode = #tpu.pipeline_mode<synchronous>, transform_indices = @transform_3, window_bounds = array<i64: 128, 128>}, {pipeline_mode = #tpu.pipeline_mode<synchronous>, transform_indices = @transform_4, window_bounds = array<i64: 1, 128>}, {pipeline_mode = #tpu.pipeline_mode<synchronous>, transform_indices = @transform_5, window_bounds = array<i64: 128, 128>}, {pipeline_mode = #tpu.pipeline_mode<synchronous>, transform_indices = @transform_6, window_bounds = array<i64: 1, 128>}, {pipeline_mode = #tpu.pipeline_mode<synchronous>, transform_indices = @transform_7, window_bounds = array<i64: 128, 32>}, {pipeline_mode = #tpu.pipeline_mode<synchronous>, transform_indices = @transform_8, window_bounds = array<i64: 1, 32>}, {transform_indices = @transform_9, window_bounds = array<i64: 8, 32>}, {transform_indices = @transform_10, window_bounds = array<i64: 8, 1>}]} {
    %c0 = arith.constant 0 : index
    %c0_0 = arith.constant 0 : index
    %0 = vector.load %arg1[%c0, %c0_0] : memref<8x32xf32, #tpu.memory_space<vmem>>, vector<8x32xf32>
    %1 = arith.truncf %0 : vector<8x32xf32> to vector<8x32xbf16>
    %c0_1 = arith.constant 0 : index
    %c0_2 = arith.constant 0 : index
    %2 = vector.load %arg2[%c0_1, %c0_2] : memref<32x128xbf16, #tpu.memory_space<vmem>>, vector<32x128xbf16>
    %cst = arith.constant dense<0.000000e+00> : vector<8x128xf32>
    %3 = tpu.matmul %1, %2, %cst {dimension_numbers = #tpu.dot_dimension_numbers<[1], [0], [0], [1], [0, 0, 1, 1], [], []>} : vector<8x32xbf16>, vector<32x128xbf16>, vector<8x128xf32> -> vector<8x128xf32>
    %c0_3 = arith.constant 0 : index
    %c0_4 = arith.constant 0 : index
    %4 = vector.load %arg3[%c0_3, %c0_4] : memref<1x128xf32, #tpu.memory_space<vmem>>, vector<1x128xf32>
    %5 = vector.broadcast %4 : vector<1x128xf32> to vector<8x128xf32>
    %6 = arith.addf %3, %5 : vector<8x128xf32>
    %cst_5 = arith.constant 0.000000e+00 : f32
    %7 = vector.broadcast %cst_5 : f32 to vector<8x128xf32>
    %8 = arith.maximumf %6, %7 : vector<8x128xf32>
    %9 = arith.truncf %8 : vector<8x128xf32> to vector<8x128xbf16>
    %c0_6 = arith.constant 0 : index
    %c0_7 = arith.constant 0 : index
    %10 = vector.load %arg4[%c0_6, %c0_7] : memref<128x128xbf16, #tpu.memory_space<vmem>>, vector<128x128xbf16>
    %cst_8 = arith.constant dense<0.000000e+00> : vector<8x128xf32>
    %11 = tpu.matmul %9, %10, %cst_8 {dimension_numbers = #tpu.dot_dimension_numbers<[1], [0], [0], [1], [0, 0, 1, 1], [], []>} : vector<8x128xbf16>, vector<128x128xbf16>, vector<8x128xf32> -> vector<8x128xf32>
    %c0_9 = arith.constant 0 : index
    %c0_10 = arith.constant 0 : index
    %12 = vector.load %arg5[%c0_9, %c0_10] : memref<1x128xf32, #tpu.memory_space<vmem>>, vector<1x128xf32>
    %13 = vector.broadcast %12 : vector<1x128xf32> to vector<8x128xf32>
    %14 = arith.addf %11, %13 : vector<8x128xf32>
    %cst_11 = arith.constant 0.000000e+00 : f32
    %15 = vector.broadcast %cst_11 : f32 to vector<8x128xf32>
    %16 = arith.maximumf %14, %15 : vector<8x128xf32>
    %17 = arith.truncf %16 : vector<8x128xf32> to vector<8x128xbf16>
    %c0_12 = arith.constant 0 : index
    %c0_13 = arith.constant 0 : index
    %18 = vector.load %arg6[%c0_12, %c0_13] : memref<128x128xbf16, #tpu.memory_space<vmem>>, vector<128x128xbf16>
    %cst_14 = arith.constant dense<0.000000e+00> : vector<8x128xf32>
    %19 = tpu.matmul %17, %18, %cst_14 {dimension_numbers = #tpu.dot_dimension_numbers<[1], [0], [0], [1], [0, 0, 1, 1], [], []>} : vector<8x128xbf16>, vector<128x128xbf16>, vector<8x128xf32> -> vector<8x128xf32>
    %c0_15 = arith.constant 0 : index
    %c0_16 = arith.constant 0 : index
    %20 = vector.load %arg7[%c0_15, %c0_16] : memref<1x128xf32, #tpu.memory_space<vmem>>, vector<1x128xf32>
    %21 = vector.broadcast %20 : vector<1x128xf32> to vector<8x128xf32>
    %22 = arith.addf %19, %21 : vector<8x128xf32>
    %cst_17 = arith.constant 0.000000e+00 : f32
    %23 = vector.broadcast %cst_17 : f32 to vector<8x128xf32>
    %24 = arith.maximumf %22, %23 : vector<8x128xf32>
    %25 = arith.truncf %24 : vector<8x128xf32> to vector<8x128xbf16>
    %c0_18 = arith.constant 0 : index
    %c0_19 = arith.constant 0 : index
    %26 = vector.load %arg8[%c0_18, %c0_19] : memref<128x32xbf16, #tpu.memory_space<vmem>>, vector<128x32xbf16>
    %cst_20 = arith.constant dense<0.000000e+00> : vector<8x32xf32>
    %27 = tpu.matmul %25, %26, %cst_20 {dimension_numbers = #tpu.dot_dimension_numbers<[1], [0], [0], [1], [0, 0, 1, 1], [], []>} : vector<8x128xbf16>, vector<128x32xbf16>, vector<8x32xf32> -> vector<8x32xf32>
    %c0_21 = arith.constant 0 : index
    %c0_22 = arith.constant 0 : index
    %28 = vector.load %arg9[%c0_21, %c0_22] : memref<1x32xf32, #tpu.memory_space<vmem>>, vector<1x32xf32>
    %29 = vector.broadcast %28 : vector<1x32xf32> to vector<8x32xf32>
    %30 = arith.addf %27, %29 : vector<8x32xf32>
    %cst_23 = arith.constant 0.000000e+00 : f32
    %31 = vector.broadcast %cst_23 : f32 to vector<8x32xf32>
    %32 = arith.maximumf %30, %31 : vector<8x32xf32>
    %c0_24 = arith.constant 0 : index
    %c0_25 = arith.constant 0 : index
    %33 = vector.load %arg10[%c0_24, %c0_25] : memref<8x32xf32, #tpu.memory_space<vmem>>, vector<8x32xf32>
    tpu.vector_store %arg10[%c0_24, %c0_25], %32 {strides = array<i32>} : memref<8x32xf32, #tpu.memory_space<vmem>>, vector<8x32xf32>,
    %34 = arith.subf %32, %0 : vector<8x32xf32>
    %35 = arith.mulf %34, %34 : vector<8x32xf32>
    %cst_26 = arith.constant dense<0.000000e+00> : vector<8xf32>
    %36 = vector.multi_reduction <add>, %35, %cst_26 [1] : vector<8x32xf32> to vector<8xf32>
    %37 = vector.shape_cast %36 : vector<8xf32> to vector<8x1xf32>
    %cst_27 = arith.constant 3.125000e-02 : f32
    %38 = vector.broadcast %cst_27 : f32 to vector<8x1xf32>
    %39 = arith.mulf %37, %38 : vector<8x1xf32>
    %c0_28 = arith.constant 0 : index
    %c0_29 = arith.constant 0 : index
    %40 = vector.load %arg11[%c0_28, %c0_29] : memref<8x1xf32, #tpu.memory_space<vmem>>, vector<8x1xf32>
    tpu.vector_store %arg11[%c0_28, %c0_29], %39 {strides = array<i32>} : memref<8x1xf32, #tpu.memory_space<vmem>>, vector<8x1xf32>,
    return
  }
  func.func @transform_0(%arg0: i32) -> (i32, i32) {
    %c0_i32 = arith.constant 0 : i32
    %c0_i32_0 = arith.constant 0 : i32
    return %arg0, %c0_i32 : i32, i32
  }
  func.func @transform_1(%arg0: i32) -> (i32, i32) {
    %c0_i32 = arith.constant 0 : i32
    %c0_i32_0 = arith.constant 0 : i32
    %c0_i32_1 = arith.constant 0 : i32
    return %c0_i32, %c0_i32_0 : i32, i32
  }
  func.func @transform_2(%arg0: i32) -> (i32, i32) {
    %c0_i32 = arith.constant 0 : i32
    %c0_i32_0 = arith.constant 0 : i32
    %c0_i32_1 = arith.constant 0 : i32
    return %c0_i32, %c0_i32_0 : i32, i32
  }
  func.func @transform_3(%arg0: i32) -> (i32, i32) {
    %c0_i32 = arith.constant 0 : i32
    %c0_i32_0 = arith.constant 0 : i32
    %c0_i32_1 = arith.constant 0 : i32
    return %c0_i32, %c0_i32_0 : i32, i32
  }
  func.func @transform_4(%arg0: i32) -> (i32, i32) {
    %c0_i32 = arith.constant 0 : i32
    %c0_i32_0 = arith.constant 0 : i32
    %c0_i32_1 = arith.constant 0 : i32
    return %c0_i32, %c0_i32_0 : i32, i32
  }
  func.func @transform_5(%arg0: i32) -> (i32, i32) {
    %c0_i32 = arith.constant 0 : i32
    %c0_i32_0 = arith.constant 0 : i32
    %c0_i32_1 = arith.constant 0 : i32
    return %c0_i32, %c0_i32_0 : i32, i32
  }
  func.func @transform_6(%arg0: i32) -> (i32, i32) {
    %c0_i32 = arith.constant 0 : i32
    %c0_i32_0 = arith.constant 0 : i32
    %c0_i32_1 = arith.constant 0 : i32
    return %c0_i32, %c0_i32_0 : i32, i32
  }
  func.func @transform_7(%arg0: i32) -> (i32, i32) {
    %c0_i32 = arith.constant 0 : i32
    %c0_i32_0 = arith.constant 0 : i32
    %c0_i32_1 = arith.constant 0 : i32
    return %c0_i32, %c0_i32_0 : i32, i32
  }
  func.func @transform_8(%arg0: i32) -> (i32, i32) {
    %c0_i32 = arith.constant 0 : i32
    %c0_i32_0 = arith.constant 0 : i32
    %c0_i32_1 = arith.constant 0 : i32
    return %c0_i32, %c0_i32_0 : i32, i32
  }
  func.func @transform_9(%arg0: i32) -> (i32, i32) {
    %c0_i32 = arith.constant 0 : i32
    %c0_i32_0 = arith.constant 0 : i32
    return %arg0, %c0_i32 : i32, i32
  }
  func.func @transform_10(%arg0: i32) -> (i32, i32) {
    %c0_i32 = arith.constant 0 : i32
    %c0_i32_0 = arith.constant 0 : i32
    return %arg0, %c0_i32 : i32, i32
  }
}

</mosaic_0001>

<llo_original>
// kernel: tpu_custom_call.1
$region0: #{tpu_custom_call.1}
  #allocation0 [shape = 'u32[]', space=smem, size = 0x4, offset = 0x4, fixed_abs, tag = 'smem constant byte address 0x4 - core index']
  #allocation1 [shape = 'u32[144,128]{1,0:T(1,128)}', space=vmem, size = 0x12000, scoped, tag = 'internal scratch']
  %s0 = inlined_call_operand.vmem [shape: f32[16,32], index: 0, kind: input, shape index: {}]
  %s1 = inlined_call_operand.hbm [shape: bf16[32,128], index: 1, kind: input, shape index: {}]
  %s2 = inlined_call_operand.vmem [shape: f32[1,128], index: 2, kind: input, shape index: {}]
  %s3 = inlined_call_operand.vmem [shape: bf16[128,128], index: 3, kind: input, shape index: {}]
  %s4 = inlined_call_operand.vmem [shape: f32[1,128], index: 4, kind: input, shape index: {}]
  %s5 = inlined_call_operand.hbm [shape: bf16[128,128], index: 5, kind: input, shape index: {}]
  %s6 = inlined_call_operand.vmem [shape: f32[1,128], index: 6, kind: input, shape index: {}]
  %s7 = inlined_call_operand.vmem [shape: bf16[128,32], index: 7, kind: input, shape index: {}]
  %s8 = inlined_call_operand.vmem [shape: f32[1,32], index: 8, kind: input, shape index: {}]
  %s9 = inlined_call_operand.hbm [shape: f32[16,32], index: 9, kind: output, shape index: {0}]
  %s10 = inlined_call_operand.vmem [shape: f32[16,1], index: 10, kind: output, shape index: {1}]
  %11 = xla_tuple %s9, %s10
  %s12 = sld [smem:[#allocation0]]
  $region85: #{tpu_custom_call.1} parent=0
    _
  %s14 = ssub.s32 1, %s12
  %s15 = scalar_select 0, %s14, %s12
  $region1: #{tpu_custom_call.1} parent=0
    #allocation2 [shape = 'u8[8192]{0}', space=vmem, size = 0x2000, scoped, tag = 'input window, operand 1, single buffered']
    #allocation3 [shape = 's32[2]{0}', space=sflag, size = 0x8, scoped, tag = 'scoped memory for tpu_custom_call.1']
    #allocation4 [shape = 's32[2]{0}', space=sflag, size = 0x8, scoped, tag = 'scoped memory for tpu_custom_call.1']
    #allocation5 [shape = 'u8[32768]{0}', space=vmem, size = 0x8000, scoped, tag = 'input window, operand 5, single buffered']
    #allocation6 [shape = 's32[1]{0}', space=sflag, size = 0x4, scoped, tag = 'scoped memory for tpu_custom_call.1']
    #allocation7 [shape = 'u8[8192]{0}', space=vmem, size = 0x2000, scoped, tag = 'output window, operand 0']
    %16 = vsyncpa [#allocation3], 0
    %17 = vsyncpa [#allocation6], 0
    %18 = vsyncpa [#allocation4], 0
    %s19 = scalar_lea.sflag [#allocation4], 1
    %20 = vsyncpa %s19, 0
    loop: start=0, step=1, limit=4
    $region2: #{tpu_custom_call.1} parent=1 // loop_pre_header
      _
    $region3: #{tpu_custom_call.1} parent=1 // loop_header
      %s22 = sphi 0, %s26
      %p23 = scmp.ge.s32.totalorder %s22, 4
      %s32 = sphi 0, %s34
      %s35 = sphi 0, %s32
      %s36 = sphi 0, %s35
      %s52 = sphi 0, %s36
      %s56 = sphi 0, %s56
      %s58 = sphi 0, %s56
      %s59 = sphi 0, %s58
      %s73 = sphi 0, %s59
      %s77 = sphi 0, %s77
      %s79 = sphi 0, %s77
      %s80 = sphi 0, %s79
      %s94 = sphi 0, %s80
      %s98 = sphi 0, %s98
      %s100 = sphi 0, %s98
      %s101 = sphi 0, %s100
      %s115 = sphi 0, %s101
      %s119 = sphi 0, %s119
      %s121 = sphi 0, %s119
      %s122 = sphi 0, %s121
      %s136 = sphi 0, %s122
      %s140 = sphi 0, %s140
      %s142 = sphi 0, %s140
      %s143 = sphi 0, %s142
      %s157 = sphi 0, %s143
      %s161 = sphi 0, %s161
      %s163 = sphi 0, %s161
      %s164 = sphi 0, %s163
      %s178 = sphi 0, %s164
      %s182 = sphi 0, %s182
      %s184 = sphi 0, %s182
      %s185 = sphi 0, %s184
      %s199 = sphi 0, %s185
      %s203 = sphi 0, %s203
      %s205 = sphi 0, %s203
      %s206 = sphi 0, %s205
      %s220 = sphi 0, %s206
      %s226 = sphi 0, %s228
      %s229 = sphi 0, %s226
      %s230 = sphi 0, %s229
      %s246 = sphi 0, %s230
      %s252 = sphi 0, %s254
      %s255 = sphi 0, %s252
      %s256 = sphi 0, %s255
      %s272 = sphi 0, %s256
    $region4: #{tpu_custom_call.1} parent=1 // loop_header_branch
      %25 = sbr.rel (%p23) target = $region8
    $region5: #{tpu_custom_call.1} parent=1 // loop_body
      %s27 = ssub.s32 %s22, 1
      %s28 = ssub.s32 %s22, 2
      %s29 = sadd.s32 %s22, 1
      %s30 = ssub.s32 %s22, %s29
      %p31 = scmp.eq.s32.totalorder %s30, 0
      %s33 = sadd.s32 %s32, 1
      %s34 = scalar_select %p31, %s32, %s33
      %p37 = pneg %p31
      %p38 = scmp.eq.s32.totalorder %s22, 1
      %p39 = por %p37, %p38
      %p40 = scmp.ne.s32.totalorder %s32, %s35
      %p41 = scmp.eq.s32.totalorder %s22, 0
      %p42 = por %p40, %p41
      %p43 = scmp.ne.s32.totalorder %s32, %s35
      %p44 = scmp.eq.s32.totalorder %s27, 1
      %p45 = por %p43, %p44
      %p46 = scmp.ne.s32.totalorder %s35, %s36
      %p47 = scmp.eq.s32.totalorder %s27, 0
      %p48 = por %p46, %p47
      %p49 = scmp.ne.s32.totalorder %s35, %s36
      %p50 = scmp.eq.s32.totalorder %s28, 1
      %p51 = por %p49, %p50
      %p53 = scmp.ne.s32.totalorder %s36, %s52
      %p54 = scmp.eq.s32.totalorder %s28, 0
      %p55 = por %p53, %p54
      %s57 = sadd.s32 %s56, 1
      %p60 = scmp.eq.s32.totalorder %s22, 1
      %p61 = scmp.ne.s32.totalorder %s56, %s58
      %p62 = scmp.eq.s32.totalorder %s22, 0
      %p63 = por %p61, %p62
      %p64 = scmp.ne.s32.totalorder %s56, %s58
      %p65 = scmp.eq.s32.totalorder %s27, 1
      %p66 = por %p64, %p65
      %p67 = scmp.ne.s32.totalorder %s58, %s59
      %p68 = scmp.eq.s32.totalorder %s27, 0
      %p69 = por %p67, %p68
      %p70 = scmp.ne.s32.totalorder %s58, %s59
      %p71 = scmp.eq.s32.totalorder %s28, 1
      %p72 = por %p70, %p71
      %p74 = scmp.ne.s32.totalorder %s59, %s73
      %p75 = scmp.eq.s32.totalorder %s28, 0
      %p76 = por %p74, %p75
      %s78 = sadd.s32 %s77, 1
      %p81 = scmp.eq.s32.totalorder %s22, 1
      %p82 = scmp.ne.s32.totalorder %s77, %s79
      %p83 = scmp.eq.s32.totalorder %s22, 0
      %p84 = por %p82, %p83
      %p85 = scmp.ne.s32.totalorder %s77, %s79
      %p86 = scmp.eq.s32.totalorder %s27, 1
      %p87 = por %p85, %p86
      %p88 = scmp.ne.s32.totalorder %s79, %s80
      %p89 = scmp.eq.s32.totalorder %s27, 0
      %p90 = por %p88, %p89
      %p91 = scmp.ne.s32.totalorder %s79, %s80
      %p92 = scmp.eq.s32.totalorder %s28, 1
      %p93 = por %p91, %p92
      %p95 = scmp.ne.s32.totalorder %s80, %s94
      %p96 = scmp.eq.s32.totalorder %s28, 0
      %p97 = por %p95, %p96
      %s99 = sadd.s32 %s98, 1
      %p102 = scmp.eq.s32.totalorder %s22, 1
      %p103 = scmp.ne.s32.totalorder %s98, %s100
      %p104 = scmp.eq.s32.totalorder %s22, 0
      %p105 = por %p103, %p104
      %p106 = scmp.ne.s32.totalorder %s98, %s100
      %p107 = scmp.eq.s32.totalorder %s27, 1
      %p108 = por %p106, %p107
      %p109 = scmp.ne.s32.totalorder %s100, %s101
      %p110 = scmp.eq.s32.totalorder %s27, 0
      %p111 = por %p109, %p110
      %p112 = scmp.ne.s32.totalorder %s100, %s101
      %p113 = scmp.eq.s32.totalorder %s28, 1
      %p114 = por %p112, %p113
      %p116 = scmp.ne.s32.totalorder %s101, %s115
      %p117 = scmp.eq.s32.totalorder %s28, 0
      %p118 = por %p116, %p117
      %s120 = sadd.s32 %s119, 1
      %p123 = scmp.eq.s32.totalorder %s22, 1
      %p124 = scmp.ne.s32.totalorder %s119, %s121
      %p125 = scmp.eq.s32.totalorder %s22, 0
      %p126 = por %p124, %p125
      %p127 = scmp.ne.s32.totalorder %s119, %s121
      %p128 = scmp.eq.s32.totalorder %s27, 1
      %p129 = por %p127, %p128
      %p130 = scmp.ne.s32.totalorder %s121, %s122
      %p131 = scmp.eq.s32.totalorder %s27, 0
      %p132 = por %p130, %p131
      %p133 = scmp.ne.s32.totalorder %s121, %s122
      %p134 = scmp.eq.s32.totalorder %s28, 1
      %p135 = por %p133, %p134
      %p137 = scmp.ne.s32.totalorder %s122, %s136
      %p138 = scmp.eq.s32.totalorder %s28, 0
      %p139 = por %p137, %p138
      %s141 = sadd.s32 %s140, 1
      %p144 = scmp.eq.s32.totalorder %s22, 1
      %p145 = scmp.ne.s32.totalorder %s140, %s142
      %p146 = scmp.eq.s32.totalorder %s22, 0
      %p147 = por %p145, %p146
      %p148 = scmp.ne.s32.totalorder %s140, %s142
      %p149 = scmp.eq.s32.totalorder %s27, 1
      %p150 = por %p148, %p149
      %p151 = scmp.ne.s32.totalorder %s142, %s143
      %p152 = scmp.eq.s32.totalorder %s27, 0
      %p153 = por %p151, %p152
      %p154 = scmp.ne.s32.totalorder %s142, %s143
      %p155 = scmp.eq.s32.totalorder %s28, 1
      %p156 = por %p154, %p155
      %p158 = scmp.ne.s32.totalorder %s143, %s157
      %p159 = scmp.eq.s32.totalorder %s28, 0
      %p160 = por %p158, %p159
      %s162 = sadd.s32 %s161, 1
      %p165 = scmp.eq.s32.totalorder %s22, 1
      %p166 = scmp.ne.s32.totalorder %s161, %s163
      %p167 = scmp.eq.s32.totalorder %s22, 0
      %p168 = por %p166, %p167
      %p169 = scmp.ne.s32.totalorder %s161, %s163
      %p170 = scmp.eq.s32.totalorder %s27, 1
      %p171 = por %p169, %p170
      %p172 = scmp.ne.s32.totalorder %s163, %s164
      %p173 = scmp.eq.s32.totalorder %s27, 0
      %p174 = por %p172, %p173
      %p175 = scmp.ne.s32.totalorder %s163, %s164
      %p176 = scmp.eq.s32.totalorder %s28, 1
      %p177 = por %p175, %p176
      %p179 = scmp.ne.s32.totalorder %s164, %s178
      %p180 = scmp.eq.s32.totalorder %s28, 0
      %p181 = por %p179, %p180
      %s183 = sadd.s32 %s182, 1
      %p186 = scmp.eq.s32.totalorder %s22, 1
      %p187 = scmp.ne.s32.totalorder %s182, %s184
      %p188 = scmp.eq.s32.totalorder %s22, 0
      %p189 = por %p187, %p188
      %p190 = scmp.ne.s32.totalorder %s182, %s184
      %p191 = scmp.eq.s32.totalorder %s27, 1
      %p192 = por %p190, %p191
      %p193 = scmp.ne.s32.totalorder %s184, %s185
      %p194 = scmp.eq.s32.totalorder %s27, 0
      %p195 = por %p193, %p194
      %p196 = scmp.ne.s32.totalorder %s184, %s185
      %p197 = scmp.eq.s32.totalorder %s28, 1
      %p198 = por %p196, %p197
      %p200 = scmp.ne.s32.totalorder %s185, %s199
      %p201 = scmp.eq.s32.totalorder %s28, 0
      %p202 = por %p200, %p201
      %s204 = sadd.s32 %s203, 1
      %p207 = scmp.eq.s32.totalorder %s22, 1
      %p208 = scmp.ne.s32.totalorder %s203, %s205
      %p209 = scmp.eq.s32.totalorder %s22, 0
      %p210 = por %p208, %p209
      %p211 = scmp.ne.s32.totalorder %s203, %s205
      %p212 = scmp.eq.s32.totalorder %s27, 1
      %p213 = por %p211, %p212
      %p214 = scmp.ne.s32.totalorder %s205, %s206
      %p215 = scmp.eq.s32.totalorder %s27, 0
      %p216 = por %p214, %p215
      %p217 = scmp.ne.s32.totalorder %s205, %s206
      %p218 = scmp.eq.s32.totalorder %s28, 1
      %p219 = por %p217, %p218
      %p221 = scmp.ne.s32.totalorder %s206, %s220
      %p222 = scmp.eq.s32.totalorder %s28, 0
      %p223 = por %p221, %p222
      %s224 = ssub.s32 %s22, %s29
      %p225 = scmp.eq.s32.totalorder %s224, 0
      %s227 = sadd.s32 %s226, 1
      %s228 = scalar_select %p225, %s226, %s227
      %p231 = pneg %p225
      %p232 = scmp.eq.s32.totalorder %s22, 1
      %p233 = por %p231, %p232
      %p234 = scmp.ne.s32.totalorder %s226, %s229
      %p235 = scmp.eq.s32.totalorder %s22, 0
      %p236 = por %p234, %p235
      %p237 = scmp.ne.s32.totalorder %s226, %s229
      %p238 = scmp.eq.s32.totalorder %s27, 1
      %p239 = por %p237, %p238
      %p240 = scmp.ne.s32.totalorder %s229, %s230
      %p241 = scmp.eq.s32.totalorder %s27, 0
      %p242 = por %p240, %p241
      %p243 = scmp.ne.s32.totalorder %s229, %s230
      %p244 = scmp.eq.s32.totalorder %s28, 1
      %p245 = por %p243, %p244
      %p247 = scmp.ne.s32.totalorder %s230, %s246
      %p248 = scmp.eq.s32.totalorder %s28, 0
      %p249 = por %p247, %p248
      %s250 = ssub.s32 %s22, %s29
      %p251 = scmp.eq.s32.totalorder %s250, 0
      %s253 = sadd.s32 %s252, 1
      %s254 = scalar_select %p251, %s252, %s253
      %p257 = pneg %p251
      %p258 = scmp.eq.s32.totalorder %s22, 1
      %p259 = por %p257, %p258
      %p260 = scmp.ne.s32.totalorder %s252, %s255
      %p261 = scmp.eq.s32.totalorder %s22, 0
      %p262 = por %p260, %p261
      %p263 = scmp.ne.s32.totalorder %s252, %s255
      %p264 = scmp.eq.s32.totalorder %s27, 1
      %p265 = por %p263, %p264
      %p266 = scmp.ne.s32.totalorder %s255, %s256
      %p267 = scmp.eq.s32.totalorder %s27, 0
      %p268 = por %p266, %p267
      %p269 = scmp.ne.s32.totalorder %s255, %s256
      %p270 = scmp.eq.s32.totalorder %s28, 1
      %p271 = por %p269, %p270
      %p273 = scmp.ne.s32.totalorder %s256, %s272
      %p274 = scmp.eq.s32.totalorder %s28, 0
      %p275 = por %p273, %p274
      %p276 = scmp.le.s32.totalorder 1, %s22
      %p277 = scmp.lt.s32.totalorder %s22, 3
      %p278 = pnand %p276, %p277
      %p279 = pneg %p278
      // Predicated region
      $region9: #{tpu_custom_call.1} parent=5 // pred_check
        _
      $region10: #{tpu_custom_call.1} parent=5 // pred_check_branch
        %281 = sbr.rel (%p278) target = $region12
      $region11: #{tpu_custom_call.1} parent=5 // pred_region
        %s282 = ssub.s32 %s22, 1
        // Predicated region
        $region13: #{tpu_custom_call.1} parent=11 // pred_check
          %p283 = pneg %p69
        $region14: #{tpu_custom_call.1} parent=11 // pred_check_branch
          %285 = sbr.rel (%p283) target = $region16
        $region15: #{tpu_custom_call.1} parent=11 // pred_region
          %s287 = ssub.s32 256, 256
          %288 = vsyncadd [#allocation3], %s287
          %s289 = sshll.u32 [#allocation2], 4
          %s290 = int_to_ptr.vmem [resolvable:$true] %s289
          %295 = dma.hbm_to_vmem [thread:$0]  %s1, 256, %s290, [#allocation3], 64, 64, 4
        $region16: #{tpu_custom_call.1} parent=11 // pred_fallthru
          _
        // Predicated region
        $region17: #{tpu_custom_call.1} parent=11 // pred_check
          %p296 = pneg %p90
        $region18: #{tpu_custom_call.1} parent=11 // pred_check_branch
          %298 = sbr.rel (%p296) target = $region20
        $region19: #{tpu_custom_call.1} parent=11 // pred_region
          _
        $region20: #{tpu_custom_call.1} parent=11 // pred_fallthru
          _
        // Predicated region
        $region21: #{tpu_custom_call.1} parent=11 // pred_check
          %p299 = pneg %p111
        $region22: #{tpu_custom_call.1} parent=11 // pred_check_branch
          %301 = sbr.rel (%p299) target = $region24
        $region23: #{tpu_custom_call.1} parent=11 // pred_region
          _
        $region24: #{tpu_custom_call.1} parent=11 // pred_fallthru
          _
        // Predicated region
        $region25: #{tpu_custom_call.1} parent=11 // pred_check
          %p302 = pneg %p132
        $region26: #{tpu_custom_call.1} parent=11 // pred_check_branch
          %304 = sbr.rel (%p302) target = $region28
        $region27: #{tpu_custom_call.1} parent=11 // pred_region
          _
        $region28: #{tpu_custom_call.1} parent=11 // pred_fallthru
          _
        // Predicated region
        $region29: #{tpu_custom_call.1} parent=11 // pred_check
          %p305 = pneg %p153
        $region30: #{tpu_custom_call.1} parent=11 // pred_check_branch
          %307 = sbr.rel (%p305) target = $region32
        $region31: #{tpu_custom_call.1} parent=11 // pred_region
          %s309 = ssub.s32 1024, 1024
          %310 = vsyncadd [#allocation6], %s309
          %s311 = sshll.u32 [#allocation5], 4
          %s312 = int_to_ptr.vmem [resolvable:$true] %s311
          %317 = dma.hbm_to_vmem [thread:$0]  %s5, 1024, %s312, [#allocation6], 64, 64, 4
        $region32: #{tpu_custom_call.1} parent=11 // pred_fallthru
          _
        // Predicated region
        $region33: #{tpu_custom_call.1} parent=11 // pred_check
          %p318 = pneg %p174
        $region34: #{tpu_custom_call.1} parent=11 // pred_check_branch
          %320 = sbr.rel (%p318) target = $region36
        $region35: #{tpu_custom_call.1} parent=11 // pred_region
          _
        $region36: #{tpu_custom_call.1} parent=11 // pred_fallthru
          _
        // Predicated region
        $region37: #{tpu_custom_call.1} parent=11 // pred_check
          %p321 = pneg %p195
        $region38: #{tpu_custom_call.1} parent=11 // pred_check_branch
          %323 = sbr.rel (%p321) target = $region40
        $region39: #{tpu_custom_call.1} parent=11 // pred_region
          _
        $region40: #{tpu_custom_call.1} parent=11 // pred_fallthru
          _
        // Predicated region
        $region41: #{tpu_custom_call.1} parent=11 // pred_check
          %p324 = pneg %p216
        $region42: #{tpu_custom_call.1} parent=11 // pred_check_branch
          %326 = sbr.rel (%p324) target = $region44
        $region43: #{tpu_custom_call.1} parent=11 // pred_region
          _
        $region44: #{tpu_custom_call.1} parent=11 // pred_fallthru
          _
      $region12: #{tpu_custom_call.1} parent=5 // pred_fallthru
        _
      %p327 = scmp.lt.s32.totalorder %s22, 2
      // Predicated region
      $region45: #{tpu_custom_call.1} parent=5 // pred_check
        %p328 = pneg %p327
      $region46: #{tpu_custom_call.1} parent=5 // pred_check_branch
        %330 = sbr.rel (%p328) target = $region48
      $region47: #{tpu_custom_call.1} parent=5 // pred_region
        // Predicated region
        $region49: #{tpu_custom_call.1} parent=47 // pred_check
          %p331 = pneg %p42
        $region50: #{tpu_custom_call.1} parent=47 // pred_check_branch
          %333 = sbr.rel (%p331) target = $region52
        $region51: #{tpu_custom_call.1} parent=47 // pred_region
          %p334 = scmp.lt.s32.totalorder %s22, 1
          %s335 = scalar_select %p334, %s22, 1
          %s336 = smul.addr %s335, 8
          %s337 = scalar_lea.vmem %s0, %s336
        $region52: #{tpu_custom_call.1} parent=47 // pred_fallthru
          _
      $region48: #{tpu_custom_call.1} parent=5 // pred_fallthru
        _
      %p338 = scmp.le.s32.totalorder 1, %s22
      %p339 = scmp.lt.s32.totalorder %s22, 3
      %p340 = pnand %p338, %p339
      %p341 = pneg %p340
      // Predicated region
      $region53: #{tpu_custom_call.1} parent=5 // pred_check
        _
      $region54: #{tpu_custom_call.1} parent=5 // pred_check_branch
        %343 = sbr.rel (%p340) target = $region56
      $region55: #{tpu_custom_call.1} parent=5 // pred_region
        %s344 = ssub.s32 %s22, 1
        // Predicated region
        $region57: #{tpu_custom_call.1} parent=55 // pred_check
          %p345 = pneg %p69
        $region58: #{tpu_custom_call.1} parent=55 // pred_check_branch
          %347 = sbr.rel (%p345) target = $region60
        $region59: #{tpu_custom_call.1} parent=55 // pred_region
          %348 = dma.done [#allocation3], 256
        $region60: #{tpu_custom_call.1} parent=55 // pred_fallthru
          _
        // Predicated region
        $region61: #{tpu_custom_call.1} parent=55 // pred_check
          %p349 = pneg %p153
        $region62: #{tpu_custom_call.1} parent=55 // pred_check_branch
          %351 = sbr.rel (%p349) target = $region64
        $region63: #{tpu_custom_call.1} parent=55 // pred_region
          %352 = dma.done [#allocation6], 1024
        $region64: #{tpu_custom_call.1} parent=55 // pred_fallthru
          _
        %p353 = scmp.lt.s32.totalorder %s27, 1
        %s354 = scalar_select %p353, %s27, 1
        %s355 = smul.addr %s354, 8
        %s356 = scalar_lea.vmem %s0, %s355
        %p357 = pneg %p48
        %p358 = pneg %p45
        %p359 = pneg %p69
        %p360 = pneg %p66
        %p361 = pneg %p90
        %p362 = pneg %p87
        %p363 = pneg %p111
        %p364 = pneg %p108
        %p365 = pneg %p132
        %p366 = pneg %p129
        %p367 = pneg %p153
        %p368 = pneg %p150
        %p369 = pneg %p174
        %p370 = pneg %p171
        %p371 = pneg %p195
        %p372 = pneg %p192
        %p373 = pneg %p216
        %p374 = pneg %p213
        %p375 = pneg %p242
        %p376 = pneg %p239
        %s377 = sand.u32 %s229, 1
        %s378 = scalar_lea.sflag [#allocation4], %s377
        %s379 = sand.u32 %s229, 1
        %s380 = smul.addr %s379, 8
        %s381 = scalar_lea.vmem [#allocation7], %s380
        %p382 = pneg %p268
        %p383 = pneg %p265
        %p384 = scmp.lt.s32.totalorder %s27, 1
        %s385 = scalar_select %p384, %s27, 1
        %s386 = smul.addr %s385, 8
        %s387 = scalar_lea.vmem %s10, %s386
        %p388 = scmp.lt.s32.totalorder %s27, 1
        %s389 = scalar_select %p388, %s27, 1
        %s390 = smul.addr %s389, 8
        %s391 = scalar_lea.vmem %s0, %s390
        %p392 = scmp.lt.s32.totalorder %s27, 1
        %s393 = scalar_select %p392, %s27, 1
        %s394 = smul.addr %s393, 8
        %s395 = scalar_lea.vmem %s10, %s394
        %v397 = vld [vmem:[%s391] sm:$0xff]
        %v398 = vpack.c.bf16 %v397, %v397
        %v399 = vld [vmem:[#allocation2] sm:$0xf]
        %v400 = vld [vmem:[#allocation2 + $0x4] sm:$0xf]
        %v401 = vld [vmem:[#allocation2 + $0x8] sm:$0xf]
        %v402 = vld [vmem:[#allocation2 + $0xc] sm:$0xf]
        %v403 = vld [vmem:[%s2] sm:$0x1]
        %v405 = vlaneseq
        %v406 = vshrl.u32 %v405, 7
        %v407 = vsub.s32 0, %v406
        %v408 = vrot.slane %v403, %v407
        %v414 = vunpack.c.l.b16 %v399
        %v415 = vunpack.c.l.b16 %v400
        %v416 = vunpack.c.l.b16 %v401
        %v417 = vunpack.c.l.b16 %v402
        %v418 = vpack.c.b16 %v415, %v414
        %v419 = vpack.c.b16 %v417, %v416
        %vm422 = vcmask 261120
        %v424 = vsel %vm422, %v398, 0
        %426 = vmatprep.subr.bf16.mxu0 0
        %427 = vmatpush1.bf16.msra.mxu0 0
        %428 = vmatprep.subr.bf16.mxu0 0
        %429 = vmatpush1.bf16.msra.mxu0 0
        %430 = vmatprep.subr.bf16.mxu0 0
        %431 = vmatpush1.bf16.msra.mxu0 0
        %432 = vmatprep.subr.bf16.mxu0 0
        %433 = vmatpush1.bf16.msra.mxu0 0
        %434 = vmatprep.subr.bf16.mxu0 0
        %435 = vmatpush1.bf16.msra.mxu0 0
        %436 = vmatprep.subr.bf16.mxu0 0
        %437 = vmatpush1.bf16.msra.mxu0 0
        %438 = vmatprep.subr.bf16.mxu0 0
        %439 = vmatpush1.bf16.msra.mxu0 %v419
        %440 = vmatprep.subr.bf16.mxu0 0
        %441 = vmatpush1.bf16.msra.mxu0 %v418
        %442 = vmatprep.subr.bf16.mxu0 0
        %443 = vmatpush2.bf16.msra.mxu0 0
        %444 = vmatprep.subr.bf16.mxu0 0
        %445 = vmatpush2.bf16.msra.mxu0 0
        %446 = vmatprep.subr.bf16.mxu0 0
        %447 = vmatpush2.bf16.msra.mxu0 0
        %448 = vmatprep.subr.bf16.mxu0 0
        %449 = vmatpush2.bf16.msra.mxu0 0
        %450 = vmatprep.subr.bf16.mxu0 0
        %451 = vmatpush2.bf16.msra.mxu0 0
        %452 = vmatprep.subr.bf16.mxu0 0
        %453 = vmatpush2.bf16.msra.mxu0 0
        %454 = vmatprep.subr.bf16.mxu0 0
        %455 = vmatpush2.bf16.msra.mxu0 0
        %456 = vmatprep.subr.bf16.mxu0 0
        %457 = vmatpush2.bf16.msra.mxu0 0
        %458 = vmatprep.mubr.bf16.mxu0 0
        %459 = vmatmul.mubr.bf16.gmra.mxu0 %v424
        %v460 = vpop.f32.mrf.mxu0
        %v461 = vadd.f32 %v408, %v460
        %v462 = vpop.f32.mrf.mxu0
        %v463 = vpop.f32.mrf.mxu0
        %v464 = vpop.f32.mrf.mxu0
        %465 = vdwg.mxu0
        %v466 = vmax.f32 %v461, 0.0
        %v467 = vpack.c.bf16 %v466, %v466
        %v468 = vld [vmem:[%s3] sm:$0xf]
        %v469 = vld [vmem:[%s3 + $0x4] sm:$0xf]
        %v470 = vld [vmem:[%s3 + $0x8] sm:$0xf]
        %v471 = vld [vmem:[%s3 + $0xc] sm:$0xf]
        %v472 = vld [vmem:[%s3 + $0x10] sm:$0xf]
        %v473 = vld [vmem:[%s3 + $0x14] sm:$0xf]
        %v474 = vld [vmem:[%s3 + $0x18] sm:$0xf]
        %v475 = vld [vmem:[%s3 + $0x1c] sm:$0xf]
        %v476 = vld [vmem:[%s3 + $0x20] sm:$0xf]
        %v477 = vld [vmem:[%s3 + $0x24] sm:$0xf]
        %v478 = vld [vmem:[%s3 + $0x28] sm:$0xf]
        %v479 = vld [vmem:[%s3 + $0x2c] sm:$0xf]
        %v480 = vld [vmem:[%s3 + $0x30] sm:$0xf]
        %v481 = vld [vmem:[%s3 + $0x34] sm:$0xf]
        %v482 = vld [vmem:[%s3 + $0x38] sm:$0xf]
        %v483 = vld [vmem:[%s3 + $0x3c] sm:$0xf]
        %v484 = vld [vmem:[%s4] sm:$0x1]
        %v486 = vlaneseq
        %v487 = vshrl.u32 %v486, 7
        %v488 = vsub.s32 0, %v487
        %v489 = vrot.slane %v484, %v488
        %v507 = vunpack.c.l.b16 %v468
        %v508 = vunpack.c.l.b16 %v469
        %v509 = vunpack.c.l.b16 %v470
        %v510 = vunpack.c.l.b16 %v471
        %v511 = vunpack.c.l.b16 %v472
        %v512 = vunpack.c.l.b16 %v473
        %v513 = vunpack.c.l.b16 %v474
        %v514 = vunpack.c.l.b16 %v475
        %v515 = vunpack.c.l.b16 %v476
        %v516 = vunpack.c.l.b16 %v477
        %v517 = vunpack.c.l.b16 %v478
        %v518 = vunpack.c.l.b16 %v479
        %v519 = vunpack.c.l.b16 %v480
        %v520 = vunpack.c.l.b16 %v481
        %v521 = vunpack.c.l.b16 %v482
        %v522 = vunpack.c.l.b16 %v483
        %v523 = vpack.c.b16 %v508, %v507
        %v524 = vpack.c.b16 %v510, %v509
        %v525 = vpack.c.b16 %v512, %v511
        %v526 = vpack.c.b16 %v514, %v513
        %v527 = vpack.c.b16 %v516, %v515
        %v528 = vpack.c.b16 %v518, %v517
        %v529 = vpack.c.b16 %v520, %v519
        %v530 = vpack.c.b16 %v522, %v521
        %539 = vmatprep.subr.bf16.mxu0 0
        %540 = vmatpush1.bf16.msra.mxu0 %v530
        %541 = vmatprep.subr.bf16.mxu0 0
        %542 = vmatpush1.bf16.msra.mxu0 %v529
        %543 = vmatprep.subr.bf16.mxu0 0
        %544 = vmatpush1.bf16.msra.mxu0 %v528
        %545 = vmatprep.subr.bf16.mxu0 0
        %546 = vmatpush1.bf16.msra.mxu0 %v527
        %547 = vmatprep.subr.bf16.mxu0 0
        %548 = vmatpush1.bf16.msra.mxu0 %v526
        %549 = vmatprep.subr.bf16.mxu0 0
        %550 = vmatpush1.bf16.msra.mxu0 %v525
        %551 = vmatprep.subr.bf16.mxu0 0
        %552 = vmatpush1.bf16.msra.mxu0 %v524
        %553 = vmatprep.subr.bf16.mxu0 0
        %554 = vmatpush1.bf16.msra.mxu0 %v523
        %555 = vmatprep.subr.bf16.mxu0 0
        %556 = vmatpush2.bf16.msra.mxu0 0
        %557 = vmatprep.subr.bf16.mxu0 0
        %558 = vmatpush2.bf16.msra.mxu0 0
        %559 = vmatprep.subr.bf16.mxu0 0
        %560 = vmatpush2.bf16.msra.mxu0 0
        %561 = vmatprep.subr.bf16.mxu0 0
        %562 = vmatpush2.bf16.msra.mxu0 0
        %563 = vmatprep.subr.bf16.mxu0 0
        %564 = vmatpush2.bf16.msra.mxu0 0
        %565 = vmatprep.subr.bf16.mxu0 0
        %566 = vmatpush2.bf16.msra.mxu0 0
        %567 = vmatprep.subr.bf16.mxu0 0
        %568 = vmatpush2.bf16.msra.mxu0 0
        %569 = vmatprep.subr.bf16.mxu0 0
        %570 = vmatpush2.bf16.msra.mxu0 0
        %571 = vmatprep.mubr.bf16.mxu0 0
        %572 = vmatmul.mubr.bf16.gmra.mxu0 %v467
        %v573 = vpop.f32.mrf.mxu0
        %v574 = vadd.f32 %v489, %v573
        %v575 = vpop.f32.mrf.mxu0
        %v576 = vpop.f32.mrf.mxu0
        %v577 = vpop.f32.mrf.mxu0
        %578 = vdwg.mxu0
        %v579 = vmax.f32 %v574, 0.0
        %v580 = vpack.c.bf16 %v579, %v579
        %v581 = vld [vmem:[#allocation5] sm:$0xf]
        %v582 = vld [vmem:[#allocation5 + $0x4] sm:$0xf]
        %v583 = vld [vmem:[#allocation5 + $0x8] sm:$0xf]
        %v584 = vld [vmem:[#allocation5 + $0xc] sm:$0xf]
        %v585 = vld [vmem:[#allocation5 + $0x10] sm:$0xf]
        %v586 = vld [vmem:[#allocation5 + $0x14] sm:$0xf]
        %v587 = vld [vmem:[#allocation5 + $0x18] sm:$0xf]
        %v588 = vld [vmem:[#allocation5 + $0x1c] sm:$0xf]
        %v589 = vld [vmem:[#allocation5 + $0x20] sm:$0xf]
        %v590 = vld [vmem:[#allocation5 + $0x24] sm:$0xf]
        %v591 = vld [vmem:[#allocation5 + $0x28] sm:$0xf]
        %v592 = vld [vmem:[#allocation5 + $0x2c] sm:$0xf]
        %v593 = vld [vmem:[#allocation5 + $0x30] sm:$0xf]
        %v594 = vld [vmem:[#allocation5 + $0x34] sm:$0xf]
        %v595 = vld [vmem:[#allocation5 + $0x38] sm:$0xf]
        %v596 = vld [vmem:[#allocation5 + $0x3c] sm:$0xf]
        %v597 = vld [vmem:[%s6] sm:$0x1]
        %v599 = vlaneseq
        %v600 = vshrl.u32 %v599, 7
        %v601 = vsub.s32 0, %v600
        %v602 = vrot.slane %v597, %v601
        %v620 = vunpack.c.l.b16 %v581
        %v621 = vunpack.c.l.b16 %v582
        %v622 = vunpack.c.l.b16 %v583
        %v623 = vunpack.c.l.b16 %v584
        %v624 = vunpack.c.l.b16 %v585
        %v625 = vunpack.c.l.b16 %v586
        %v626 = vunpack.c.l.b16 %v587
        %v627 = vunpack.c.l.b16 %v588
        %v628 = vunpack.c.l.b16 %v589
        %v629 = vunpack.c.l.b16 %v590
        %v630 = vunpack.c.l.b16 %v591
        %v631 = vunpack.c.l.b16 %v592
        %v632 = vunpack.c.l.b16 %v593
        %v633 = vunpack.c.l.b16 %v594
        %v634 = vunpack.c.l.b16 %v595
        %v635 = vunpack.c.l.b16 %v596
        %v636 = vpack.c.b16 %v621, %v620
        %v637 = vpack.c.b16 %v623, %v622
        %v638 = vpack.c.b16 %v625, %v624
        %v639 = vpack.c.b16 %v627, %v626
        %v640 = vpack.c.b16 %v629, %v628
        %v641 = vpack.c.b16 %v631, %v630
        %v642 = vpack.c.b16 %v633, %v632
        %v643 = vpack.c.b16 %v635, %v634
        %652 = vmatprep.subr.bf16.mxu0 0
        %653 = vmatpush1.bf16.msra.mxu0 %v643
        %654 = vmatprep.subr.bf16.mxu0 0
        %655 = vmatpush1.bf16.msra.mxu0 %v642
        %656 = vmatprep.subr.bf16.mxu0 0
        %657 = vmatpush1.bf16.msra.mxu0 %v641
        %658 = vmatprep.subr.bf16.mxu0 0
        %659 = vmatpush1.bf16.msra.mxu0 %v640
        %660 = vmatprep.subr.bf16.mxu0 0
        %661 = vmatpush1.bf16.msra.mxu0 %v639
        %662 = vmatprep.subr.bf16.mxu0 0
        %663 = vmatpush1.bf16.msra.mxu0 %v638
        %664 = vmatprep.subr.bf16.mxu0 0
        %665 = vmatpush1.bf16.msra.mxu0 %v637
        %666 = vmatprep.subr.bf16.mxu0 0
        %667 = vmatpush1.bf16.msra.mxu0 %v636
        %668 = vmatprep.subr.bf16.mxu0 0
        %669 = vmatpush2.bf16.msra.mxu0 0
        %670 = vmatprep.subr.bf16.mxu0 0
        %671 = vmatpush2.bf16.msra.mxu0 0
        %672 = vmatprep.subr.bf16.mxu0 0
        %673 = vmatpush2.bf16.msra.mxu0 0
        %674 = vmatprep.subr.bf16.mxu0 0
        %675 = vmatpush2.bf16.msra.mxu0 0
        %676 = vmatprep.subr.bf16.mxu0 0
        %677 = vmatpush2.bf16.msra.mxu0 0
        %678 = vmatprep.subr.bf16.mxu0 0
        %679 = vmatpush2.bf16.msra.mxu0 0
        %680 = vmatprep.subr.bf16.mxu0 0
        %681 = vmatpush2.bf16.msra.mxu0 0
        %682 = vmatprep.subr.bf16.mxu0 0
        %683 = vmatpush2.bf16.msra.mxu0 0
        %684 = vmatprep.mubr.bf16.mxu0 0
        %685 = vmatmul.mubr.bf16.gmra.mxu0 %v580
        %v686 = vpop.f32.mrf.mxu0
        %v687 = vadd.f32 %v602, %v686
        %v688 = vpop.f32.mrf.mxu0
        %v689 = vpop.f32.mrf.mxu0
        %v690 = vpop.f32.mrf.mxu0
        %691 = vdwg.mxu0
        %v692 = vmax.f32 %v687, 0.0
        %v693 = vpack.c.bf16 %v692, %v692
        %v694 = vld [vmem:[%s7] sm:$0xf]
        %v695 = vld [vmem:[%s7 + $0x4] sm:$0xf]
        %v696 = vld [vmem:[%s7 + $0x8] sm:$0xf]
        %v697 = vld [vmem:[%s7 + $0xc] sm:$0xf]
        %v698 = vld [vmem:[%s7 + $0x10] sm:$0xf]
        %v699 = vld [vmem:[%s7 + $0x14] sm:$0xf]
        %v700 = vld [vmem:[%s7 + $0x18] sm:$0xf]
        %v701 = vld [vmem:[%s7 + $0x1c] sm:$0xf]
        %v702 = vld [vmem:[%s7 + $0x20] sm:$0xf]
        %v703 = vld [vmem:[%s7 + $0x24] sm:$0xf]
        %v704 = vld [vmem:[%s7 + $0x28] sm:$0xf]
        %v705 = vld [vmem:[%s7 + $0x2c] sm:$0xf]
        %v706 = vld [vmem:[%s7 + $0x30] sm:$0xf]
        %v707 = vld [vmem:[%s7 + $0x34] sm:$0xf]
        %v708 = vld [vmem:[%s7 + $0x38] sm:$0xf]
        %v709 = vld [vmem:[%s7 + $0x3c] sm:$0xf]
        %v710 = vld [vmem:[%s8] sm:$0x1]
        %v712 = vlaneseq
        %v713 = vshrl.u32 %v712, 7
        %v714 = vsub.s32 0, %v713
        %v715 = vrot.slane %v710, %v714
        %v733 = vunpack.c.l.b16 %v694
        %v734 = vunpack.c.l.b16 %v695
        %v735 = vunpack.c.l.b16 %v696
        %v736 = vunpack.c.l.b16 %v697
        %v737 = vunpack.c.l.b16 %v698
        %v738 = vunpack.c.l.b16 %v699
        %v739 = vunpack.c.l.b16 %v700
        %v740 = vunpack.c.l.b16 %v701
        %v741 = vunpack.c.l.b16 %v702
        %v742 = vunpack.c.l.b16 %v703
        %v743 = vunpack.c.l.b16 %v704
        %v744 = vunpack.c.l.b16 %v705
        %v745 = vunpack.c.l.b16 %v706
        %v746 = vunpack.c.l.b16 %v707
        %v747 = vunpack.c.l.b16 %v708
        %v748 = vunpack.c.l.b16 %v709
        %v749 = vpack.c.b16 %v734, %v733
        %v750 = vpack.c.b16 %v736, %v735
        %v751 = vpack.c.b16 %v738, %v737
        %v752 = vpack.c.b16 %v740, %v739
        %v753 = vpack.c.b16 %v742, %v741
        %v754 = vpack.c.b16 %v744, %v743
        %v755 = vpack.c.b16 %v746, %v745
        %v756 = vpack.c.b16 %v748, %v747
        %765 = vmatprep.subr.bf16.mxu0 0
        %766 = vmatpush1.bf16.msra.mxu0 %v756
        %767 = vmatprep.subr.bf16.mxu0 0
        %768 = vmatpush1.bf16.msra.mxu0 %v755
        %769 = vmatprep.subr.bf16.mxu0 0
        %770 = vmatpush1.bf16.msra.mxu0 %v754
        %771 = vmatprep.subr.bf16.mxu0 0
        %772 = vmatpush1.bf16.msra.mxu0 %v753
        %773 = vmatprep.subr.bf16.mxu0 0
        %774 = vmatpush1.bf16.msra.mxu0 %v752
        %775 = vmatprep.subr.bf16.mxu0 0
        %776 = vmatpush1.bf16.msra.mxu0 %v751
        %777 = vmatprep.subr.bf16.mxu0 0
        %778 = vmatpush1.bf16.msra.mxu0 %v750
        %779 = vmatprep.subr.bf16.mxu0 0
        %780 = vmatpush1.bf16.msra.mxu0 %v749
        %781 = vmatprep.subr.bf16.mxu0 0
        %782 = vmatpush2.bf16.msra.mxu0 0
        %783 = vmatprep.subr.bf16.mxu0 0
        %784 = vmatpush2.bf16.msra.mxu0 0
        %785 = vmatprep.subr.bf16.mxu0 0
        %786 = vmatpush2.bf16.msra.mxu0 0
        %787 = vmatprep.subr.bf16.mxu0 0
        %788 = vmatpush2.bf16.msra.mxu0 0
        %789 = vmatprep.subr.bf16.mxu0 0
        %790 = vmatpush2.bf16.msra.mxu0 0
        %791 = vmatprep.subr.bf16.mxu0 0
        %792 = vmatpush2.bf16.msra.mxu0 0
        %793 = vmatprep.subr.bf16.mxu0 0
        %794 = vmatpush2.bf16.msra.mxu0 0
        %795 = vmatprep.subr.bf16.mxu0 0
        %796 = vmatpush2.bf16.msra.mxu0 0
        %797 = vmatprep.mubr.bf16.mxu0 0
        %798 = vmatmul.mubr.bf16.gmra.mxu0 %v693
        %v799 = vpop.f32.mrf.mxu0
        %v800 = vadd.f32 %v715, %v799
        %v801 = vpop.f32.mrf.mxu0
        %v802 = vpop.f32.mrf.mxu0
        %v803 = vpop.f32.mrf.mxu0
        %804 = vdwg.mxu0
        %v805 = vmax.f32 %v800, 0.0
        %806 = vst.msk [vmem:[%s381] sm:$0xff] %vm422, %v805
        %v807 = vsub.f32 %v805, %v397
        %v808 = vmul.f32 %v807, %v807
        %v809 = vsel %vm422, %v808, 0.0
        %810 = vadd.xlane.f32.xlu0 %v809
        %v811 = vpop.xlane.xlu0 %810
        %v812 = vmul.f32 %v811, 0.03125
        %vm813 = vcmask 7168
        %814 = vst.msk [vmem:[%s395] sm:$0xff] %vm813, %v812
        %s815 = sand.u32 %s229, 1
        %s816 = scalar_lea.sflag [#allocation4], %s815
        %s817 = sand.u32 %s229, 1
        %s818 = smul.addr %s817, 8
        %s819 = scalar_lea.vmem [#allocation7], %s818
        %p820 = scmp.lt.s32.totalorder %s27, 1
        %s821 = scalar_select %p820, %s27, 1
        %s822 = smul.addr %s821, 8
        %s823 = scalar_lea.vmem %s10, %s822
        // Predicated region
        $region65: #{tpu_custom_call.1} parent=55 // pred_check
          %p824 = pneg %p239
        $region66: #{tpu_custom_call.1} parent=55 // pred_check_branch
          %826 = sbr.rel (%p824) target = $region68
        $region67: #{tpu_custom_call.1} parent=55 // pred_region
          %s828 = ssub.s32 128, 128
          %829 = vsyncadd %s816, %s828
          %s830 = smul.addr %s27, 128
          %s831 = scalar_lea.hbm %s9, %s830
          %s833 = sshll.u32 %s819, 4
          %s834 = int_to_ptr.vmem [resolvable:$true] %s833
          %836 = dma.vmem_to_hbm [thread:$0]  %s834, 128, %s831, %s816
        $region68: #{tpu_custom_call.1} parent=55 // pred_fallthru
          _
        // Predicated region
        $region69: #{tpu_custom_call.1} parent=55 // pred_check
          %p837 = pneg %p265
        $region70: #{tpu_custom_call.1} parent=55 // pred_check_branch
          %839 = sbr.rel (%p837) target = $region72
        $region71: #{tpu_custom_call.1} parent=55 // pred_region
          _
        $region72: #{tpu_custom_call.1} parent=55 // pred_fallthru
          _
      $region56: #{tpu_custom_call.1} parent=5 // pred_fallthru
        _
      %p840 = scmp.le.s32.totalorder 2, %s22
      // Predicated region
      $region73: #{tpu_custom_call.1} parent=5 // pred_check
        %p841 = pneg %p840
      $region74: #{tpu_custom_call.1} parent=5 // pred_check_branch
        %843 = sbr.rel (%p841) target = $region76
      $region75: #{tpu_custom_call.1} parent=5 // pred_region
        %s844 = ssub.s32 %s22, 2
        // Predicated region
        $region77: #{tpu_custom_call.1} parent=75 // pred_check
          %p845 = pneg %p245
        $region78: #{tpu_custom_call.1} parent=75 // pred_check_branch
          %847 = sbr.rel (%p845) target = $region80
        $region79: #{tpu_custom_call.1} parent=75 // pred_region
          %s848 = sand.u32 %s230, 1
          %s849 = scalar_lea.sflag [#allocation4], %s848
          %s850 = sand.u32 %s230, 1
          %s851 = smul.addr %s850, 8
          %s852 = scalar_lea.vmem [#allocation7], %s851
          %853 = dma.done %s849, 128
        $region80: #{tpu_custom_call.1} parent=75 // pred_fallthru
          _
        // Predicated region
        $region81: #{tpu_custom_call.1} parent=75 // pred_check
          %p854 = pneg %p271
        $region82: #{tpu_custom_call.1} parent=75 // pred_check_branch
          %856 = sbr.rel (%p854) target = $region84
        $region83: #{tpu_custom_call.1} parent=75 // pred_region
          %p857 = scmp.lt.s32.totalorder %s28, 1
          %s858 = scalar_select %p857, %s28, 1
          %s859 = smul.addr %s858, 8
          %s860 = scalar_lea.vmem %s10, %s859
        $region84: #{tpu_custom_call.1} parent=75 // pred_fallthru
          _
      $region76: #{tpu_custom_call.1} parent=5 // pred_fallthru
        _
    $region6: #{tpu_custom_call.1} parent=1 // loop_footer
      %s26 = sadd.s32 1, %s22
    $region7: #{tpu_custom_call.1} parent=1 // loop_footer_branch
      %21 = sbr.rel target = $region3
    $region8: #{tpu_custom_call.1} parent=1 // loop_exit
      _
    %861 = vsyncpa [#allocation3], 1
    %s862 = scalar_lea.sflag [#allocation3], 1
    %863 = vsyncpa %s862, 1
    %864 = vsyncpa [#allocation6], 1
    %865 = vsyncpa [#allocation4], 1
    %s866 = scalar_lea.sflag [#allocation4], 1
    %867 = vsyncpa %s866, 1

</llo_original>
